<compile_context>
chip_gen: v6e
topology: v6e:2x2x1
jax: 0.10.0
libtpu: 0.0.40
codegen_flags: <defaults>
</compile_context>

<pallas_src>
import functools

import jax
import jax.numpy as jnp
from jax import lax
from jax.experimental import pallas as pl
from jax.experimental.pallas import tpu as pltpu


def _round_up(v, m):
    return ((v + m - 1) // m) * m


# ----------------------------------------------------------------------------
# Pass 1: z = W @ x tile on MXU; per-channel sum / sum-of-squares on VPU/XLU
# ----------------------------------------------------------------------------
def _stats_kernel(x_ref, w_ref, s1_ref, s2_ref, *, ts, s_total, n_s_tiles):
    si = pl.program_id(1)

    @pl.when(si == 0)
    def _init():
        s1_ref[...] = jnp.zeros_like(s1_ref)
        s2_ref[...] = jnp.zeros_like(s2_ref)

    # 1x1 conv == MXU matmul: (Cp, K) @ (K, TS) -> (Cp, TS), f32 accumulation.
    z = jnp.dot(w_ref[...], x_ref[...], preferred_element_type=jnp.float32)

    def _accum(zv):
        # Per-channel sums over the spatial (lane) axis: cheap vector-unit
        # work that hides under the DMA; keeps the MXU free for the matmul.
        s1_ref[...] += jnp.sum(zv, axis=-1, keepdims=True)
        s2_ref[...] += jnp.sum(zv * zv, axis=-1, keepdims=True)

    if s_total % ts == 0:
        _accum(z)                      # no masking work on any tile
    else:
        @pl.when(si < n_s_tiles - 1)
        def _full():
            _accum(z)

        @pl.when(si == n_s_tiles - 1)
        def _tail():
            # Mask out-of-bounds lanes of the partial last tile only.
            cols = si * ts + lax.broadcasted_iota(jnp.int32, z.shape, 1)
            _accum(jnp.where(cols < s_total, z, 0.0))


# ----------------------------------------------------------------------------
# Pass 2: recompute z, apply folded BatchNorm scale/shift, write NCHW directly
# ----------------------------------------------------------------------------
def _normalize_kernel(x_ref, w_ref, scale_ref, shift_ref, o_ref):
    z = jnp.dot(w_ref[...], x_ref[...], preferred_element_type=jnp.float32)
    y = z * scale_ref[...] + shift_ref[...]
    cout = o_ref.shape[0]
    if y.shape[0] != cout:             # strip sublane padding (trace-time)
        y = y[:cout, :]
    o_ref[...] = y.astype(o_ref.dtype)


# ----------------------------------------------------------------------------
# Wrapper
# ----------------------------------------------------------------------------
def cut_forward(x, w, b, gamma, beta, eps=1e-5):
    """x: (N, C, H, W) f32. w: (Cout, 4*C), b/gamma/beta: (Cout,).

    Returns (N, Cout, H//2, W//2) f32 (training-mode BatchNorm statistics).
    """
    del b  # conv bias cancels exactly under training-mode BatchNorm
    N, C, H, W = x.shape
    Cout = w.shape[0]
    H2, W2 = H // 2, W // 2
    K, S = 4 * C, H2 * W2
    M = N * S
    Cp = _round_up(Cout, 8)            # sublane-aligned channel count

    # --- prologue: space-to-channel, channels-first (N, K, S); K order is
    # (cc, r, C), matching torch.cat([x[..,0::2,0::2], x[..,1::2,0::2],
    #                                 x[..,0::2,1::2], x[..,1::2,1::2]], dim=1)
    # TODO(synk): fold this rearrangement + bf16 cast into the kernels (in-
    # kernel strided deinterleave) to save one HBM round trip of the input.
    xt = (x.reshape(N, C, H2, 2, W2, 2)
            .transpose(0, 5, 3, 1, 2, 4)          # (N, cc, r, C, H2, W2)
            .reshape(N, K, S)
            .astype(jnp.bfloat16))                # bf16 operand: native MXU

    wp = jnp.zeros((Cp, K), jnp.bfloat16).at[:Cout, :].set(
        w.astype(jnp.bfloat16))

    # --- spatial tile: sized from the per-generation VMEM capacity
    try:
        vmem_cap = int(pltpu.get_tpu_info().vmem_capacity_bytes)
    except Exception:                              # conservative, v7x-safe
        vmem_cap = 64 * 1024 * 1024
    vmem_limit = int(min((vmem_cap * 3) // 4, 96 * 1024 * 1024))
    budget = vmem_limit // 2
    # per spatial column: double-buffered bf16 x tile + double-buffered f32
    # out tile + ~3 f32 (Cp, TS) in-kernel temporaries (z, z*z / scaled z)
    per_col = 2 * (K * 2) + 2 * (Cout * 4) + 3 * (Cp * 4)
    fixed = 2 * (Cp * K * 2) + 4 * (Cp * 4)        # weight buffers + vectors
    ts_cap = max(128, ((budget - fixed) // per_col) // 128 * 128)
    TS = S if S <= ts_cap else int(ts_cap)         # full dim or mult. of 128
    nS = pl.cdiv(S, TS)

    x_spec = pl.BlockSpec((None, K, TS), lambda n, s: (n, 0, s))
    w_spec = pl.BlockSpec((Cp, K), lambda n, s: (0, 0))
    v_spec = pl.BlockSpec((Cp, 1), lambda n, s: (0, 0))

    # --- pass 1: per-batch-element partial per-channel sum / sum-of-squares
    s1, s2 = pl.pallas_call(
        functools.partial(_stats_kernel, ts=TS, s_total=S, n_s_tiles=nS),
        out_shape=(jax.ShapeDtypeStruct((N, Cp, 1), jnp.float32),
                   jax.ShapeDtypeStruct((N, Cp, 1), jnp.float32)),
        grid_spec=pltpu.PrefetchScalarGridSpec(
            num_scalar_prefetch=0,
            grid=(N, nS),
            in_specs=[x_spec, w_spec],
            out_specs=[pl.BlockSpec((None, Cp, 1), lambda n, s: (n, 0, 0)),
                       pl.BlockSpec((None, Cp, 1), lambda n, s: (n, 0, 0))]),
        compiler_params=pltpu.CompilerParams(
            dimension_semantics=("parallel", "arbitrary"),
            vmem_limit_bytes=vmem_limit),
        cost_estimate=pl.CostEstimate(
            flops=2 * M * K * Cp + 3 * M * Cp,
            transcendentals=0,
            bytes_accessed=M * K * 2 + Cp * K * 2 + 2 * N * Cp * 4),
    )(xt, wp)

    # --- host: fold training-mode BN (biased variance) into scale/shift.
    # Conv bias b cancels: y = z + b => mean_y = mean_z + b, var_y = var_z.
    # TODO(synk): one-pass E[z^2]-E[z]^2 in f32 can cancel if |mean| >> std;
    # switch to a shifted / Welford-style accumulation if such configs appear.
    sum1 = jnp.sum(s1[:, :, 0], axis=0)
    sum2 = jnp.sum(s2[:, :, 0], axis=0)
    mean = sum1 / M
    var = jnp.maximum(sum2 / M - mean * mean, 0.0)
    gp = jnp.zeros((Cp,), jnp.float32).at[:Cout].set(gamma.astype(jnp.float32))
    bep = jnp.zeros((Cp,), jnp.float32).at[:Cout].set(beta.astype(jnp.float32))
    scale = gp * lax.rsqrt(var + eps)
    shift = bep - mean * scale
    scale = scale.reshape(Cp, 1)
    shift = shift.reshape(Cp, 1)

    # --- pass 2: recompute z (K is small) and write normalized NCHW output
    out = pl.pallas_call(
        _normalize_kernel,
        out_shape=jax.ShapeDtypeStruct((N, Cout, S), jnp.float32),
        grid_spec=pltpu.PrefetchScalarGridSpec(
            num_scalar_prefetch=0,
            grid=(N, nS),
            in_specs=[x_spec, w_spec, v_spec, v_spec],
            out_specs=pl.BlockSpec((None, Cout, TS), lambda n, s: (n, 0, s))),
        compiler_params=pltpu.CompilerParams(
            dimension_semantics=("parallel", "parallel"),
            vmem_limit_bytes=vmem_limit),
        cost_estimate=pl.CostEstimate(
            flops=2 * M * K * Cp + 2 * M * Cout,
            transcendentals=0,
            bytes_accessed=M * K * 2 + Cp * K * 2 + 2 * Cp * 4 + M * Cout * 4),
    )(xt, wp, scale, shift)

    # metadata-only reshape back to NCHW (no extra HBM pass)
    return out.reshape(N, Cout, H2, W2)


# ----------------------------------------------------------------------------
# Pure-JAX (f32) reference of the PyTorch forward (training-mode BN)
# ----------------------------------------------------------------------------
def _reference(x, w, b, gamma, beta):
    x0 = x[:, :, 0::2, 0::2]
    x1 = x[:, :, 1::2, 0::2]
    x2 = x[:, :, 0::2, 1::2]
    x3 = x[:, :, 1::2, 1::2]
    xc = jnp.concatenate([x0, x1, x2, x3], axis=1)
    y = jnp.einsum("nkhw,ok->nohw", xc, w) + b[None, :, None, None]
    mean = jnp.mean(y, axis=(0, 2, 3), keepdims=True)
    var = jnp.mean((y - mean) ** 2, axis=(0, 2, 3), keepdims=True)
    yh = (y - mean) / jnp.sqrt(var + 1e-5)
    return yh * gamma[None, :, None, None] + beta[None, :, None, None]


if __name__ == "__main__":
    key = jax.random.PRNGKey(0)
    k_x, k_w, k_b, k_g, k_be = jax.random.split(key, 5)

    N, C_in, H, W = 2, 4, 16, 16
    C_out = 8

    x = jax.random.normal(k_x, (N, C_in, H, W), dtype=jnp.float32)

    # Conv2d(4*C_in, C_out, kernel_size=1) + BatchNorm2d(C_out) parameters
    fan_in = 4 * C_in
    w = jax.random.uniform(k_w, (C_out, 4 * C_in), jnp.float32,
                           minval=-1.0, maxval=1.0) / jnp.sqrt(fan_in)
    b = jax.random.uniform(k_b, (C_out,), jnp.float32,
                           minval=-1.0, maxval=1.0) / jnp.sqrt(fan_in)
    gamma = 1.0 + 0.1 * jax.random.normal(k_g, (C_out,), jnp.float32)
    beta = 0.1 * jax.random.normal(k_be, (C_out,), jnp.float32)

    fwd = jax.jit(cut_forward)
    out = jax.block_until_ready(fwd(x, w, b, gamma, beta))
    ref = _reference(x, w, b, gamma, beta)

    assert out.shape == (N, C_out, H // 2, W // 2), out.shape
    # bf16 matmul operands (f32 accumulation) => slightly looser tolerance
    # than a pure-f32 reference comparison.
    assert jnp.allclose(out, ref, atol=5e-2, rtol=5e-2), \
        float(jnp.max(jnp.abs(out - ref)))

    print("KERNEL_OK")
</pallas_src>

<mosaic_0001>
module attributes {stable_mosaic.version = 11 : i64} {
  func.func @_normalize_kernel(%arg0: i32, %arg1: i32, %arg2: memref<1x16x64xbf16, #tpu.memory_space<vmem>>, %arg3: memref<8x16xbf16, #tpu.memory_space<vmem>>, %arg4: memref<8x1xf32, #tpu.memory_space<vmem>>, %arg5: memref<8x1xf32, #tpu.memory_space<vmem>>, %arg6: memref<1x8x64xf32, #tpu.memory_space<vmem>>) attributes {dimension_semantics = [#tpu.dimension_semantics<parallel>, #tpu.dimension_semantics<parallel>], iteration_bounds = array<i64: 2, 1>, scalar_prefetch = 0 : i64, scratch_operands = 0 : i64, tpu.core_type = #tpu.core_type<tc>, window_params = [{transform_indices = @transform_0, window_bounds = array<i64: 1, 16, 64>}, {pipeline_mode = #tpu.pipeline_mode<synchronous>, transform_indices = @transform_1, window_bounds = array<i64: 8, 16>}, {pipeline_mode = #tpu.pipeline_mode<synchronous>, transform_indices = @transform_2, window_bounds = array<i64: 8, 1>}, {pipeline_mode = #tpu.pipeline_mode<synchronous>, transform_indices = @transform_3, window_bounds = array<i64: 8, 1>}, {transform_indices = @transform_4, window_bounds = array<i64: 1, 8, 64>}]} {
    %c0 = arith.constant 0 : index
    %c0_0 = arith.constant 0 : index
    %0 = vector.load %arg3[%c0, %c0_0] : memref<8x16xbf16, #tpu.memory_space<vmem>>, vector<8x16xbf16>
    %c0_1 = arith.constant 0 : index
    %c0_2 = arith.constant 0 : index
    %c0_3 = arith.constant 0 : index
    %1 = vector.load %arg2[%c0_1, %c0_2, %c0_3] : memref<1x16x64xbf16, #tpu.memory_space<vmem>>, vector<1x16x64xbf16>
    %2 = vector.shape_cast %1 : vector<1x16x64xbf16> to vector<16x64xbf16>
    %cst = arith.constant dense<0.000000e+00> : vector<8x64xf32>
    %3 = tpu.matmul %0, %2, %cst {dimension_numbers = #tpu.dot_dimension_numbers<[1], [0], [0], [1], [0, 0, 1, 1], [], []>} : vector<8x16xbf16>, vector<16x64xbf16>, vector<8x64xf32> -> vector<8x64xf32>
    %c0_4 = arith.constant 0 : index
    %c0_5 = arith.constant 0 : index
    %4 = vector.load %arg4[%c0_4, %c0_5] : memref<8x1xf32, #tpu.memory_space<vmem>>, vector<8x1xf32>
    %5 = vector.broadcast %4 : vector<8x1xf32> to vector<8x64xf32>
    %6 = arith.mulf %3, %5 : vector<8x64xf32>
    %c0_6 = arith.constant 0 : index
    %c0_7 = arith.constant 0 : index
    %7 = vector.load %arg5[%c0_6, %c0_7] : memref<8x1xf32, #tpu.memory_space<vmem>>, vector<8x1xf32>
    %8 = vector.broadcast %7 : vector<8x1xf32> to vector<8x64xf32>
    %9 = arith.addf %6, %8 : vector<8x64xf32>
    %c0_8 = arith.constant 0 : index
    %c0_9 = arith.constant 0 : index
    %c0_10 = arith.constant 0 : index
    %10 = vector.load %arg6[%c0_8, %c0_9, %c0_10] : memref<1x8x64xf32, #tpu.memory_space<vmem>>, vector<1x8x64xf32>
    %11 = vector.shape_cast %10 : vector<1x8x64xf32> to vector<8x64xf32>
    %12 = vector.shape_cast %9 : vector<8x64xf32> to vector<1x8x64xf32>
    tpu.vector_store %arg6[%c0_8, %c0_9, %c0_10], %12 {strides = array<i32>} : memref<1x8x64xf32, #tpu.memory_space<vmem>>, vector<1x8x64xf32>,
    return
  }
  func.func @transform_0(%arg0: i32, %arg1: i32) -> (i32, i32, i32) {
    %c0_i32 = arith.constant 0 : i32
    %c0_i32_0 = arith.constant 0 : i32
    return %arg0, %c0_i32, %arg1 : i32, i32, i32
  }
  func.func @transform_1(%arg0: i32, %arg1: i32) -> (i32, i32) {
    %c0_i32 = arith.constant 0 : i32
    %c0_i32_0 = arith.constant 0 : i32
    %c0_i32_1 = arith.constant 0 : i32
    return %c0_i32, %c0_i32_0 : i32, i32
  }
  func.func @transform_2(%arg0: i32, %arg1: i32) -> (i32, i32) {
    %c0_i32 = arith.constant 0 : i32
    %c0_i32_0 = arith.constant 0 : i32
    %c0_i32_1 = arith.constant 0 : i32
    return %c0_i32, %c0_i32_0 : i32, i32
  }
  func.func @transform_3(%arg0: i32, %arg1: i32) -> (i32, i32) {
    %c0_i32 = arith.constant 0 : i32
    %c0_i32_0 = arith.constant 0 : i32
    %c0_i32_1 = arith.constant 0 : i32
    return %c0_i32, %c0_i32_0 : i32, i32
  }
  func.func @transform_4(%arg0: i32, %arg1: i32) -> (i32, i32, i32) {
    %c0_i32 = arith.constant 0 : i32
    %c0_i32_0 = arith.constant 0 : i32
    return %arg0, %c0_i32, %arg1 : i32, i32, i32
  }
}

module attributes {stable_mosaic.version = 11 : i64} {
  func.func @_stats_kernel(%arg0: i32, %arg1: i32, %arg2: memref<1x16x64xbf16, #tpu.memory_space<vmem>>, %arg3: memref<8x16xbf16, #tpu.memory_space<vmem>>, %arg4: memref<1x8x1xf32, #tpu.memory_space<vmem>>, %arg5: memref<1x8x1xf32, #tpu.memory_space<vmem>>) attributes {dimension_semantics = [#tpu.dimension_semantics<parallel>, #tpu.dimension_semantics<arbitrary>], iteration_bounds = array<i64: 2, 1>, scalar_prefetch = 0 : i64, scratch_operands = 0 : i64, tpu.core_type = #tpu.core_type<tc>, window_params = [{transform_indices = @transform_0, window_bounds = array<i64: 1, 16, 64>}, {pipeline_mode = #tpu.pipeline_mode<synchronous>, transform_indices = @transform_1, window_bounds = array<i64: 8, 16>}, {transform_indices = @transform_2, window_bounds = array<i64: 1, 8, 1>}, {transform_indices = @transform_3, window_bounds = array<i64: 1, 8, 1>}]} {
    %c0_i32 = arith.constant 0 : i32
    %0 = arith.cmpi eq, %arg1, %c0_i32 : i32
    %1 = arith.extui %0 : i1 to i32
    %c0_i32_0 = arith.constant 0 : i32
    %2 = arith.cmpi ne, %1, %c0_i32_0 : i32
    scf.if %2 {
      %cst_19 = arith.constant 0.000000e+00 : f32
      %24 = vector.broadcast %cst_19 : f32 to vector<8x1xf32>
      %c0_20 = arith.constant 0 : index
      %c0_21 = arith.constant 0 : index
      %c0_22 = arith.constant 0 : index
      %25 = vector.load %arg4[%c0_20, %c0_21, %c0_22] : memref<1x8x1xf32, #tpu.memory_space<vmem>>, vector<1x8x1xf32>
      %26 = vector.shape_cast %25 : vector<1x8x1xf32> to vector<8x1xf32>
      %27 = vector.shape_cast %24 : vector<8x1xf32> to vector<1x8x1xf32>
      tpu.vector_store %arg4[%c0_20, %c0_21, %c0_22], %27 {strides = array<i32>} : memref<1x8x1xf32, #tpu.memory_space<vmem>>, vector<1x8x1xf32>,
      %cst_23 = arith.constant 0.000000e+00 : f32
      %28 = vector.broadcast %cst_23 : f32 to vector<8x1xf32>
      %c0_24 = arith.constant 0 : index
      %c0_25 = arith.constant 0 : index
      %c0_26 = arith.constant 0 : index
      %29 = vector.load %arg5[%c0_24, %c0_25, %c0_26] : memref<1x8x1xf32, #tpu.memory_space<vmem>>, vector<1x8x1xf32>
      %30 = vector.shape_cast %29 : vector<1x8x1xf32> to vector<8x1xf32>
      %31 = vector.shape_cast %28 : vector<8x1xf32> to vector<1x8x1xf32>
      tpu.vector_store %arg5[%c0_24, %c0_25, %c0_26], %31 {strides = array<i32>} : memref<1x8x1xf32, #tpu.memory_space<vmem>>, vector<1x8x1xf32>,
    } else {
    }
    %c0 = arith.constant 0 : index
    %c0_1 = arith.constant 0 : index
    %3 = vector.load %arg3[%c0, %c0_1] : memref<8x16xbf16, #tpu.memory_space<vmem>>, vector<8x16xbf16>
    %c0_2 = arith.constant 0 : index
    %c0_3 = arith.constant 0 : index
    %c0_4 = arith.constant 0 : index
    %4 = vector.load %arg2[%c0_2, %c0_3, %c0_4] : memref<1x16x64xbf16, #tpu.memory_space<vmem>>, vector<1x16x64xbf16>
    %5 = vector.shape_cast %4 : vector<1x16x64xbf16> to vector<16x64xbf16>
    %cst = arith.constant dense<0.000000e+00> : vector<8x64xf32>
    %6 = tpu.matmul %3, %5, %cst {dimension_numbers = #tpu.dot_dimension_numbers<[1], [0], [0], [1], [0, 0, 1, 1], [], []>} : vector<8x16xbf16>, vector<16x64xbf16>, vector<8x64xf32> -> vector<8x64xf32>
    %c0_5 = arith.constant 0 : index
    %c0_6 = arith.constant 0 : index
    %c0_7 = arith.constant 0 : index
    %7 = vector.load %arg4[%c0_5, %c0_6, %c0_7] : memref<1x8x1xf32, #tpu.memory_space<vmem>>, vector<1x8x1xf32>
    %8 = vector.shape_cast %7 : vector<1x8x1xf32> to vector<8x1xf32>
    %cst_8 = arith.constant dense<0.000000e+00> : vector<8xf32>
    %9 = vector.multi_reduction <add>, %6, %cst_8 [1] : vector<8x64xf32> to vector<8xf32>
    %10 = vector.shape_cast %9 : vector<8xf32> to vector<8x1xf32>
    %11 = arith.addf %8, %10 : vector<8x1xf32>
    %c0_9 = arith.constant 0 : index
    %c0_10 = arith.constant 0 : index
    %c0_11 = arith.constant 0 : index
    %12 = vector.load %arg4[%c0_9, %c0_10, %c0_11] : memref<1x8x1xf32, #tpu.memory_space<vmem>>, vector<1x8x1xf32>
    %13 = vector.shape_cast %12 : vector<1x8x1xf32> to vector<8x1xf32>
    %14 = vector.shape_cast %11 : vector<8x1xf32> to vector<1x8x1xf32>
    tpu.vector_store %arg4[%c0_9, %c0_10, %c0_11], %14 {strides = array<i32>} : memref<1x8x1xf32, #tpu.memory_space<vmem>>, vector<1x8x1xf32>,
    %c0_12 = arith.constant 0 : index
    %c0_13 = arith.constant 0 : index
    %c0_14 = arith.constant 0 : index
    %15 = vector.load %arg5[%c0_12, %c0_13, %c0_14] : memref<1x8x1xf32, #tpu.memory_space<vmem>>, vector<1x8x1xf32>
    %16 = vector.shape_cast %15 : vector<1x8x1xf32> to vector<8x1xf32>
    %17 = arith.mulf %6, %6 : vector<8x64xf32>
    %cst_15 = arith.constant dense<0.000000e+00> : vector<8xf32>
    %18 = vector.multi_reduction <add>, %17, %cst_15 [1] : vector<8x64xf32> to vector<8xf32>
    %19 = vector.shape_cast %18 : vector<8xf32> to vector<8x1xf32>
    %20 = arith.addf %16, %19 : vector<8x1xf32>
    %c0_16 = arith.constant 0 : index
    %c0_17 = arith.constant 0 : index
    %c0_18 = arith.constant 0 : index
    %21 = vector.load %arg5[%c0_16, %c0_17, %c0_18] : memref<1x8x1xf32, #tpu.memory_space<vmem>>, vector<1x8x1xf32>
    %22 = vector.shape_cast %21 : vector<1x8x1xf32> to vector<8x1xf32>
    %23 = vector.shape_cast %20 : vector<8x1xf32> to vector<1x8x1xf32>
    tpu.vector_store %arg5[%c0_16, %c0_17, %c0_18], %23 {strides = array<i32>} : memref<1x8x1xf32, #tpu.memory_space<vmem>>, vector<1x8x1xf32>,
    return
  }
  func.func @transform_0(%arg0: i32, %arg1: i32) -> (i32, i32, i32) {
    %c0_i32 = arith.constant 0 : i32
    %c0_i32_0 = arith.constant 0 : i32
    return %arg0, %c0_i32, %arg1 : i32, i32, i32
  }
  func.func @transform_1(%arg0: i32, %arg1: i32) -> (i32, i32) {
    %c0_i32 = arith.constant 0 : i32
    %c0_i32_0 = arith.constant 0 : i32
    %c0_i32_1 = arith.constant 0 : i32
    return %c0_i32, %c0_i32_0 : i32, i32
  }
  func.func @transform_2(%arg0: i32, %arg1: i32) -> (i32, i32, i32) {
    %c0_i32 = arith.constant 0 : i32
    %c0_i32_0 = arith.constant 0 : i32
    %c0_i32_1 = arith.constant 0 : i32
    return %arg0, %c0_i32, %c0_i32_0 : i32, i32, i32
  }
  func.func @transform_3(%arg0: i32, %arg1: i32) -> (i32, i32, i32) {
    %c0_i32 = arith.constant 0 : i32
    %c0_i32_0 = arith.constant 0 : i32
    %c0_i32_1 = arith.constant 0 : i32
    return %arg0, %c0_i32, %c0_i32_0 : i32, i32, i32
  }
}

</mosaic_0001>

<llo_original>
// kernel: cut_forward.2
$region0: #{cut_forward.2}
  #allocation0 [shape = 'u32[]', space=smem, size = 0x4, offset = 0x4, fixed_abs, tag = 'smem constant byte address 0x4 - core index']
  #allocation1 [shape = 'u32[144,128]{1,0:T(1,128)}', space=vmem, size = 0x12000, scoped, tag = 'internal scratch']
  %s0 = inlined_call_operand.vmem [shape: bf16[2,16,64], index: 0, kind: input, shape index: {}]
  %s1 = inlined_call_operand.vmem [shape: bf16[8,16], index: 1, kind: input, shape index: {}]
  %s2 = inlined_call_operand.vmem [shape: f32[2,8,1], index: 2, kind: output, shape index: {0}]
  %s3 = inlined_call_operand.vmem [shape: f32[2,8,1], index: 3, kind: output, shape index: {1}]
  %4 = xla_tuple %s2, %s3
  %s5 = sld [smem:[#allocation0]]
  $region53: #{cut_forward.2} parent=0
    _
  %s7 = ssub.s32 1, %s5
  %s8 = scalar_select 0, %s7, %s5
  loop: start=0, step=1, limit=4
  $region2: #{cut_forward.2} parent=0 // loop_pre_header
    _
  $region3: #{cut_forward.2} parent=0 // loop_header
    %s10 = sphi 0, %s14
    %p11 = scmp.ge.s32.totalorder %s10, 4
    %s17 = sphi 0, %s29
    %s18 = sphi 0, %s25
    %s19 = sphi 0, %s17
    %s20 = sphi 0, %s18
    %s21 = sphi 0, %s19
    %s22 = sphi 0, %s20
    %s34 = sphi 0, %s36
    %s37 = sphi 0, %s34
    %s38 = sphi 0, %s37
    %s54 = sphi 0, %s38
    %s58 = sphi 0, %s58
    %s60 = sphi 0, %s58
    %s61 = sphi 0, %s60
    %s75 = sphi 0, %s61
    %s81 = sphi 0, %s83
    %s84 = sphi 0, %s81
    %s85 = sphi 0, %s84
    %s101 = sphi 0, %s85
    %s107 = sphi 0, %s109
    %s110 = sphi 0, %s107
    %s111 = sphi 0, %s110
    %s127 = sphi 0, %s111
  $region4: #{cut_forward.2} parent=0 // loop_header_branch
    %13 = sbr.rel (%p11) target = $region8
  $region5: #{cut_forward.2} parent=0 // loop_body
    %s15 = ssub.s32 %s10, 1
    %s16 = ssub.s32 %s10, 2
    %s23 = sadd.s32 1, %s18
    %p24 = scmp.ge.s32.totalorder %s23, 1
    %s25 = scalar_select %p24, 0, %s23
    %s26 = sadd.s32 1, %s17
    %s27 = scalar_select %p24, %s26, %s17
    %p28 = scmp.ge.s32.totalorder %s27, 2
    %s29 = scalar_select %p28, 0, %s27
    %s30 = ssub.s32 %s17, %s29
    %s31 = ssub.s32 %s18, %s25
    %s32 = sor.u32 %s30, %s31
    %p33 = scmp.eq.s32.totalorder %s32, 0
    %s35 = sadd.s32 %s34, 1
    %s36 = scalar_select %p33, %s34, %s35
    %p39 = pneg %p33
    %p40 = scmp.eq.s32.totalorder %s10, 1
    %p41 = por %p39, %p40
    %p42 = scmp.ne.s32.totalorder %s34, %s37
    %p43 = scmp.eq.s32.totalorder %s10, 0
    %p44 = por %p42, %p43
    %p45 = scmp.ne.s32.totalorder %s34, %s37
    %p46 = scmp.eq.s32.totalorder %s15, 1
    %p47 = por %p45, %p46
    %p48 = scmp.ne.s32.totalorder %s37, %s38
    %p49 = scmp.eq.s32.totalorder %s15, 0
    %p50 = por %p48, %p49
    %p51 = scmp.ne.s32.totalorder %s37, %s38
    %p52 = scmp.eq.s32.totalorder %s16, 1
    %p53 = por %p51, %p52
    %p55 = scmp.ne.s32.totalorder %s38, %s54
    %p56 = scmp.eq.s32.totalorder %s16, 0
    %p57 = por %p55, %p56
    %s59 = sadd.s32 %s58, 1
    %p62 = scmp.eq.s32.totalorder %s10, 1
    %p63 = scmp.ne.s32.totalorder %s58, %s60
    %p64 = scmp.eq.s32.totalorder %s10, 0
    %p65 = por %p63, %p64
    %p66 = scmp.ne.s32.totalorder %s58, %s60
    %p67 = scmp.eq.s32.totalorder %s15, 1
    %p68 = por %p66, %p67
    %p69 = scmp.ne.s32.totalorder %s60, %s61
    %p70 = scmp.eq.s32.totalorder %s15, 0
    %p71 = por %p69, %p70
    %p72 = scmp.ne.s32.totalorder %s60, %s61
    %p73 = scmp.eq.s32.totalorder %s16, 1
    %p74 = por %p72, %p73
    %p76 = scmp.ne.s32.totalorder %s61, %s75
    %p77 = scmp.eq.s32.totalorder %s16, 0
    %p78 = por %p76, %p77
    %s79 = ssub.s32 %s17, %s29
    %p80 = scmp.eq.s32.totalorder %s79, 0
    %s82 = sadd.s32 %s81, 1
    %s83 = scalar_select %p80, %s81, %s82
    %p86 = pneg %p80
    %p87 = scmp.eq.s32.totalorder %s10, 1
    %p88 = por %p86, %p87
    %p89 = scmp.ne.s32.totalorder %s81, %s84
    %p90 = scmp.eq.s32.totalorder %s10, 0
    %p91 = por %p89, %p90
    %p92 = scmp.ne.s32.totalorder %s81, %s84
    %p93 = scmp.eq.s32.totalorder %s15, 1
    %p94 = por %p92, %p93
    %p95 = scmp.ne.s32.totalorder %s84, %s85
    %p96 = scmp.eq.s32.totalorder %s15, 0
    %p97 = por %p95, %p96
    %p98 = scmp.ne.s32.totalorder %s84, %s85
    %p99 = scmp.eq.s32.totalorder %s16, 1
    %p100 = por %p98, %p99
    %p102 = scmp.ne.s32.totalorder %s85, %s101
    %p103 = scmp.eq.s32.totalorder %s16, 0
    %p104 = por %p102, %p103
    %s105 = ssub.s32 %s17, %s29
    %p106 = scmp.eq.s32.totalorder %s105, 0
    %s108 = sadd.s32 %s107, 1
    %s109 = scalar_select %p106, %s107, %s108
    %p112 = pneg %p106
    %p113 = scmp.eq.s32.totalorder %s10, 1
    %p114 = por %p112, %p113
    %p115 = scmp.ne.s32.totalorder %s107, %s110
    %p116 = scmp.eq.s32.totalorder %s10, 0
    %p117 = por %p115, %p116
    %p118 = scmp.ne.s32.totalorder %s107, %s110
    %p119 = scmp.eq.s32.totalorder %s15, 1
    %p120 = por %p118, %p119
    %p121 = scmp.ne.s32.totalorder %s110, %s111
    %p122 = scmp.eq.s32.totalorder %s15, 0
    %p123 = por %p121, %p122
    %p124 = scmp.ne.s32.totalorder %s110, %s111
    %p125 = scmp.eq.s32.totalorder %s16, 1
    %p126 = por %p124, %p125
    %p128 = scmp.ne.s32.totalorder %s111, %s127
    %p129 = scmp.eq.s32.totalorder %s16, 0
    %p130 = por %p128, %p129
    %p131 = scmp.le.s32.totalorder 1, %s10
    %p132 = scmp.lt.s32.totalorder %s10, 3
    %p133 = pnand %p131, %p132
    %p134 = pneg %p133
    // Predicated region
    $region9: #{cut_forward.2} parent=5 // pred_check
      _
    $region10: #{cut_forward.2} parent=5 // pred_check_branch
      %136 = sbr.rel (%p133) target = $region12
    $region11: #{cut_forward.2} parent=5 // pred_region
      %s137 = ssub.s32 %s10, 1
      // Predicated region
      $region13: #{cut_forward.2} parent=11 // pred_check
        %p138 = pneg %p71
      $region14: #{cut_forward.2} parent=11 // pred_check_branch
        %140 = sbr.rel (%p138) target = $region16
      $region15: #{cut_forward.2} parent=11 // pred_region
        _
      $region16: #{cut_forward.2} parent=11 // pred_fallthru
        _
    $region12: #{cut_forward.2} parent=5 // pred_fallthru
      _
    %p141 = scmp.lt.s32.totalorder %s10, 2
    // Predicated region
    $region17: #{cut_forward.2} parent=5 // pred_check
      %p142 = pneg %p141
    $region18: #{cut_forward.2} parent=5 // pred_check_branch
      %144 = sbr.rel (%p142) target = $region20
    $region19: #{cut_forward.2} parent=5 // pred_region
      // Predicated region
      $region21: #{cut_forward.2} parent=19 // pred_check
        %p145 = pneg %p44
      $region22: #{cut_forward.2} parent=19 // pred_check_branch
        %147 = sbr.rel (%p145) target = $region24
      $region23: #{cut_forward.2} parent=19 // pred_region
        %p148 = scmp.lt.s32.totalorder %s17, 1
        %s149 = scalar_select %p148, %s17, 1
        %p150 = scmp.lt.s32.totalorder %s18, 0
        %s151 = scalar_select %p150, %s18, 0
        %s152 = smul.addr %s149, 2
        %s153 = sadd.s32 %s151, %s152
        %s154 = smul.addr %s153, 4
        %s155 = scalar_lea.vmem %s0, %s154
      $region24: #{cut_forward.2} parent=19 // pred_fallthru
        _
    $region20: #{cut_forward.2} parent=5 // pred_fallthru
      _
    %p156 = scmp.le.s32.totalorder 1, %s10
    %p157 = scmp.lt.s32.totalorder %s10, 3
    %p158 = pnand %p156, %p157
    %p159 = pneg %p158
    // Predicated region
    $region25: #{cut_forward.2} parent=5 // pred_check
      _
    $region26: #{cut_forward.2} parent=5 // pred_check_branch
      %161 = sbr.rel (%p158) target = $region28
    $region27: #{cut_forward.2} parent=5 // pred_region
      %s162 = ssub.s32 %s10, 1
      %p163 = scmp.lt.s32.totalorder %s19, 1
      %s164 = scalar_select %p163, %s19, 1
      %p165 = scmp.lt.s32.totalorder %s20, 0
      %s166 = scalar_select %p165, %s20, 0
      %s167 = smul.addr %s164, 2
      %s168 = sadd.s32 %s166, %s167
      %s169 = smul.addr %s168, 4
      %s170 = scalar_lea.vmem %s0, %s169
      %p171 = pneg %p50
      %p172 = pneg %p47
      %p173 = pneg %p71
      %p174 = pneg %p68
      %p175 = pneg %p97
      %p176 = pneg %p94
      %p177 = scmp.lt.s32.totalorder %s19, 1
      %s178 = scalar_select %p177, %s19, 1
      %s179 = smul.addr %s178, 8
      %s180 = scalar_lea.vmem %s2, %s179
      %p181 = pneg %p123
      %p182 = pneg %p120
      %p183 = scmp.lt.s32.totalorder %s19, 1
      %s184 = scalar_select %p183, %s19, 1
      %s185 = smul.addr %s184, 8
      %s186 = scalar_lea.vmem %s3, %s185
      %p187 = scmp.lt.s32.totalorder %s19, 1
      %s188 = scalar_select %p187, %s19, 1
      %p189 = scmp.lt.s32.totalorder %s20, 0
      %s190 = scalar_select %p189, %s20, 0
      %s191 = smul.addr %s188, 2
      %s192 = sadd.s32 %s190, %s191
      %s193 = smul.addr %s192, 4
      %s194 = scalar_lea.vmem %s0, %s193
      %p195 = scmp.lt.s32.totalorder %s19, 1
      %s196 = scalar_select %p195, %s19, 1
      %s197 = smul.addr %s196, 8
      %s198 = scalar_lea.vmem %s2, %s197
      %p199 = scmp.lt.s32.totalorder %s19, 1
      %s200 = scalar_select %p199, %s19, 1
      %s201 = smul.addr %s200, 8
      %s202 = scalar_lea.vmem %s3, %s201
      %p204 = scmp.eq.s32.totalorder %s20, 0
      // Predicated region
      $region29: #{cut_forward.2} parent=27 // pred_check
        %p205 = pneg %p204
      $region30: #{cut_forward.2} parent=27 // pred_check_branch
        %207 = sbr.rel (%p205) target = $region32
      $region31: #{cut_forward.2} parent=27 // pred_region
        %vm208 = vcmask 7168
        %209 = vst.msk [vmem:[%s198] sm:$0xff] %vm208, 0.0
        %210 = vst.msk [vmem:[%s202] sm:$0xff] %vm208, 0.0
      $region32: #{cut_forward.2} parent=27 // pred_fallthru
        _
      %v211 = vld [vmem:[%s1] sm:$0xf]
      %v212 = vld [vmem:[%s194] sm:$0xf]
      %v213 = vld [vmem:[%s194 + $0x4] sm:$0xf]
      %v216 = vunpack.c.l.b16 %v212
      %v217 = vunpack.c.l.b16 %v213
      %v218 = vpack.c.b16 %v217, %v216
      %vm220 = vcmask 130048
      %v222 = vsel %vm220, %v211, 0
      %224 = vmatprep.subr.bf16.mxu0 0
      %225 = vmatpush1.bf16.msra.mxu0 0
      %226 = vmatprep.subr.bf16.mxu0 0
      %227 = vmatpush1.bf16.msra.mxu0 0
      %228 = vmatprep.subr.bf16.mxu0 0
      %229 = vmatpush1.bf16.msra.mxu0 0
      %230 = vmatprep.subr.bf16.mxu0 0
      %231 = vmatpush1.bf16.msra.mxu0 0
      %232 = vmatprep.subr.bf16.mxu0 0
      %233 = vmatpush1.bf16.msra.mxu0 0
      %234 = vmatprep.subr.bf16.mxu0 0
      %235 = vmatpush1.bf16.msra.mxu0 0
      %236 = vmatprep.subr.bf16.mxu0 0
      %237 = vmatpush1.bf16.msra.mxu0 0
      %238 = vmatprep.subr.bf16.mxu0 0
      %239 = vmatpush1.bf16.msra.mxu0 %v218
      %240 = vmatprep.subr.bf16.mxu0 0
      %241 = vmatpush2.bf16.msra.mxu0 0
      %242 = vmatprep.subr.bf16.mxu0 0
      %243 = vmatpush2.bf16.msra.mxu0 0
      %244 = vmatprep.subr.bf16.mxu0 0
      %245 = vmatpush2.bf16.msra.mxu0 0
      %246 = vmatprep.subr.bf16.mxu0 0
      %247 = vmatpush2.bf16.msra.mxu0 0
      %248 = vmatprep.subr.bf16.mxu0 0
      %249 = vmatpush2.bf16.msra.mxu0 0
      %250 = vmatprep.subr.bf16.mxu0 0
      %251 = vmatpush2.bf16.msra.mxu0 0
      %252 = vmatprep.subr.bf16.mxu0 0
      %253 = vmatpush2.bf16.msra.mxu0 0
      %254 = vmatprep.subr.bf16.mxu0 0
      %255 = vmatpush2.bf16.msra.mxu0 0
      %256 = vmatprep.mubr.bf16.mxu0 0
      %257 = vmatmul.mubr.bf16.gmra.mxu0 %v222
      %v258 = vpop.f32.mrf.mxu0
      %v259 = vadd.f32 0.0, %v258
      %v260 = vpop.f32.mrf.mxu0
      %v261 = vpop.f32.mrf.mxu0
      %v262 = vpop.f32.mrf.mxu0
      %263 = vdwg.mxu0
      %v264 = vld [vmem:[%s198] sm:$0xff]
      %vm265 = vcmask 523264
      %v266 = vsel %vm265, %v259, 0.0
      %267 = vadd.xlane.f32.xlu0 %v266
      %v268 = vpop.xlane.xlu0 %267
      %v269 = vadd.f32 %v264, %v268
      %vm270 = vcmask 7168
      %271 = vst.msk [vmem:[%s198] sm:$0xff] %vm270, %v269
      %v272 = vld [vmem:[%s202] sm:$0xff]
      %v273 = vmul.f32 %v259, %v259
      %v274 = vsel %vm265, %v273, 0.0
      %275 = vadd.xlane.f32.xlu0 %v274
      %v276 = vpop.xlane.xlu0 %275
      %v277 = vadd.f32 %v272, %v276
      %278 = vst.msk [vmem:[%s202] sm:$0xff] %vm270, %v277
      %p279 = scmp.lt.s32.totalorder %s19, 1
      %s280 = scalar_select %p279, %s19, 1
      %s281 = smul.addr %s280, 8
      %s282 = scalar_lea.vmem %s2, %s281
      %p283 = scmp.lt.s32.totalorder %s19, 1
      %s284 = scalar_select %p283, %s19, 1
      %s285 = smul.addr %s284, 8
      %s286 = scalar_lea.vmem %s3, %s285
      // Predicated region
      $region33: #{cut_forward.2} parent=27 // pred_check
        %p287 = pneg %p94
      $region34: #{cut_forward.2} parent=27 // pred_check_branch
        %289 = sbr.rel (%p287) target = $region36
      $region35: #{cut_forward.2} parent=27 // pred_region
        _
      $region36: #{cut_forward.2} parent=27 // pred_fallthru
        _
      // Predicated region
      $region37: #{cut_forward.2} parent=27 // pred_check
        %p290 = pneg %p120
      $region38: #{cut_forward.2} parent=27 // pred_check_branch
        %292 = sbr.rel (%p290) target = $region40
      $region39: #{cut_forward.2} parent=27 // pred_region
        _
      $region40: #{cut_forward.2} parent=27 // pred_fallthru
        _
    $region28: #{cut_forward.2} parent=5 // pred_fallthru
      _
    %p293 = scmp.le.s32.totalorder 2, %s10
    // Predicated region
    $region41: #{cut_forward.2} parent=5 // pred_check
      %p294 = pneg %p293
    $region42: #{cut_forward.2} parent=5 // pred_check_branch
      %296 = sbr.rel (%p294) target = $region44
    $region43: #{cut_forward.2} parent=5 // pred_region
      %s297 = ssub.s32 %s10, 2
      // Predicated region
      $region45: #{cut_forward.2} parent=43 // pred_check
        %p298 = pneg %p100
      $region46: #{cut_forward.2} parent=43 // pred_check_branch
        %300 = sbr.rel (%p298) target = $region48
      $region47: #{cut_forward.2} parent=43 // pred_region
        %p301 = scmp.lt.s32.totalorder %s21, 1
        %s302 = scalar_select %p301, %s21, 1
        %s303 = smul.addr %s302, 8
        %s304 = scalar_lea.vmem %s2, %s303
      $region48: #{cut_forward.2} parent=43 // pred_fallthru
        _
      // Predicated region
      $region49: #{cut_forward.2} parent=43 // pred_check
        %p305 = pneg %p126
      $region50: #{cut_forward.2} parent=43 // pred_check_branch
        %307 = sbr.rel (%p305) target = $region52
      $region51: #{cut_forward.2} parent=43 // pred_region
        %p308 = scmp.lt.s32.totalorder %s21, 1
        %s309 = scalar_select %p308, %s21, 1
        %s310 = smul.addr %s309, 8
        %s311 = scalar_lea.vmem %s3, %s310
      $region52: #{cut_forward.2} parent=43 // pred_fallthru
        _
    $region44: #{cut_forward.2} parent=5 // pred_fallthru
      _
  $region6: #{cut_forward.2} parent=0 // loop_footer
    %s14 = sadd.s32 1, %s10
  $region7: #{cut_forward.2} parent=0 // loop_footer_branch
    %9 = sbr.rel target = $region3
  $region8: #{cut_forward.2} parent=0 // loop_exit
    _

// kernel: cut_forward.3
$region0: #{cut_forward.3}
  #allocation0 [shape = 'u32[]', space=smem, size = 0x4, offset = 0x4, fixed_abs, tag = 'smem constant byte address 0x4 - core index']
  #allocation1 [shape = 'u32[144,128]{1,0:T(1,128)}', space=vmem, size = 0x12000, scoped, tag = 'internal scratch']
  %s0 = inlined_call_operand.vmem [shape: bf16[2,16,64], index: 0, kind: input, shape index: {}]
  %s1 = inlined_call_operand.vmem [shape: bf16[8,16], index: 1, kind: input, shape index: {}]
  %s2 = inlined_call_operand.vmem [shape: f32[8,1], index: 2, kind: input, shape index: {}]
  %s3 = inlined_call_operand.vmem [shape: f32[8,1], index: 3, kind: input, shape index: {}]
  %s4 = inlined_call_operand.vmem [shape: f32[2,8,64], index: 4, kind: output, shape index: {}]
  %s5 = sld [smem:[#allocation0]]
  $region49: #{cut_forward.3} parent=0
    _
  %s7 = ssub.s32 1, %s5
  %s8 = scalar_select 0, %s7, %s5
  loop: start=0, step=1, limit=4
  $region2: #{cut_forward.3} parent=0 // loop_pre_header
    _
  $region3: #{cut_forward.3} parent=0 // loop_header
    %s10 = sphi 0, %s14
    %p11 = scmp.ge.s32.totalorder %s10, 4
    %s17 = sphi 0, %s29
    %s18 = sphi 0, %s25
    %s19 = sphi 0, %s17
    %s20 = sphi 0, %s18
    %s21 = sphi 0, %s19
    %s22 = sphi 0, %s20
    %s34 = sphi 0, %s36
    %s37 = sphi 0, %s34
    %s38 = sphi 0, %s37
    %s54 = sphi 0, %s38
    %s58 = sphi 0, %s58
    %s60 = sphi 0, %s58
    %s61 = sphi 0, %s60
    %s75 = sphi 0, %s61
    %s79 = sphi 0, %s79
    %s81 = sphi 0, %s79
    %s82 = sphi 0, %s81
    %s96 = sphi 0, %s82
    %s100 = sphi 0, %s100
    %s102 = sphi 0, %s100
    %s103 = sphi 0, %s102
    %s117 = sphi 0, %s103
    %s125 = sphi 0, %s127
    %s128 = sphi 0, %s125
    %s129 = sphi 0, %s128
    %s145 = sphi 0, %s129
  $region4: #{cut_forward.3} parent=0 // loop_header_branch
    %13 = sbr.rel (%p11) target = $region8
  $region5: #{cut_forward.3} parent=0 // loop_body
    %s15 = ssub.s32 %s10, 1
    %s16 = ssub.s32 %s10, 2
    %s23 = sadd.s32 1, %s18
    %p24 = scmp.ge.s32.totalorder %s23, 1
    %s25 = scalar_select %p24, 0, %s23
    %s26 = sadd.s32 1, %s17
    %s27 = scalar_select %p24, %s26, %s17
    %p28 = scmp.ge.s32.totalorder %s27, 2
    %s29 = scalar_select %p28, 0, %s27
    %s30 = ssub.s32 %s17, %s29
    %s31 = ssub.s32 %s18, %s25
    %s32 = sor.u32 %s30, %s31
    %p33 = scmp.eq.s32.totalorder %s32, 0
    %s35 = sadd.s32 %s34, 1
    %s36 = scalar_select %p33, %s34, %s35
    %p39 = pneg %p33
    %p40 = scmp.eq.s32.totalorder %s10, 1
    %p41 = por %p39, %p40
    %p42 = scmp.ne.s32.totalorder %s34, %s37
    %p43 = scmp.eq.s32.totalorder %s10, 0
    %p44 = por %p42, %p43
    %p45 = scmp.ne.s32.totalorder %s34, %s37
    %p46 = scmp.eq.s32.totalorder %s15, 1
    %p47 = por %p45, %p46
    %p48 = scmp.ne.s32.totalorder %s37, %s38
    %p49 = scmp.eq.s32.totalorder %s15, 0
    %p50 = por %p48, %p49
    %p51 = scmp.ne.s32.totalorder %s37, %s38
    %p52 = scmp.eq.s32.totalorder %s16, 1
    %p53 = por %p51, %p52
    %p55 = scmp.ne.s32.totalorder %s38, %s54
    %p56 = scmp.eq.s32.totalorder %s16, 0
    %p57 = por %p55, %p56
    %s59 = sadd.s32 %s58, 1
    %p62 = scmp.eq.s32.totalorder %s10, 1
    %p63 = scmp.ne.s32.totalorder %s58, %s60
    %p64 = scmp.eq.s32.totalorder %s10, 0
    %p65 = por %p63, %p64
    %p66 = scmp.ne.s32.totalorder %s58, %s60
    %p67 = scmp.eq.s32.totalorder %s15, 1
    %p68 = por %p66, %p67
    %p69 = scmp.ne.s32.totalorder %s60, %s61
    %p70 = scmp.eq.s32.totalorder %s15, 0
    %p71 = por %p69, %p70
    %p72 = scmp.ne.s32.totalorder %s60, %s61
    %p73 = scmp.eq.s32.totalorder %s16, 1
    %p74 = por %p72, %p73
    %p76 = scmp.ne.s32.totalorder %s61, %s75
    %p77 = scmp.eq.s32.totalorder %s16, 0
    %p78 = por %p76, %p77
    %s80 = sadd.s32 %s79, 1
    %p83 = scmp.eq.s32.totalorder %s10, 1
    %p84 = scmp.ne.s32.totalorder %s79, %s81
    %p85 = scmp.eq.s32.totalorder %s10, 0
    %p86 = por %p84, %p85
    %p87 = scmp.ne.s32.totalorder %s79, %s81
    %p88 = scmp.eq.s32.totalorder %s15, 1
    %p89 = por %p87, %p88
    %p90 = scmp.ne.s32.totalorder %s81, %s82
    %p91 = scmp.eq.s32.totalorder %s15, 0
    %p92 = por %p90, %p91
    %p93 = scmp.ne.s32.totalorder %s81, %s82
    %p94 = scmp.eq.s32.totalorder %s16, 1
    %p95 = por %p93, %p94
    %p97 = scmp.ne.s32.totalorder %s82, %s96
    %p98 = scmp.eq.s32.totalorder %s16, 0
    %p99 = por %p97, %p98
    %s101 = sadd.s32 %s100, 1
    %p104 = scmp.eq.s32.totalorder %s10, 1
    %p105 = scmp.ne.s32.totalorder %s100, %s102
    %p106 = scmp.eq.s32.totalorder %s10, 0
    %p107 = por %p105, %p106
    %p108 = scmp.ne.s32.totalorder %s100, %s102
    %p109 = scmp.eq.s32.totalorder %s15, 1
    %p110 = por %p108, %p109
    %p111 = scmp.ne.s32.totalorder %s102, %s103
    %p112 = scmp.eq.s32.totalorder %s15, 0
    %p113 = por %p111, %p112
    %p114 = scmp.ne.s32.totalorder %s102, %s103
    %p115 = scmp.eq.s32.totalorder %s16, 1
    %p116 = por %p114, %p115
    %p118 = scmp.ne.s32.totalorder %s103, %s117
    %p119 = scmp.eq.s32.totalorder %s16, 0
    %p120 = por %p118, %p119
    %s121 = ssub.s32 %s17, %s29
    %s122 = ssub.s32 %s18, %s25
    %s123 = sor.u32 %s121, %s122
    %p124 = scmp.eq.s32.totalorder %s123, 0
    %s126 = sadd.s32 %s125, 1
    %s127 = scalar_select %p124, %s125, %s126
    %p130 = pneg %p124
    %p131 = scmp.eq.s32.totalorder %s10, 1
    %p132 = por %p130, %p131
    %p133 = scmp.ne.s32.totalorder %s125, %s128
    %p134 = scmp.eq.s32.totalorder %s10, 0
    %p135 = por %p133, %p134
    %p136 = scmp.ne.s32.totalorder %s125, %s128
    %p137 = scmp.eq.s32.totalorder %s15, 1
    %p138 = por %p136, %p137
    %p139 = scmp.ne.s32.totalorder %s128, %s129
    %p140 = scmp.eq.s32.totalorder %s15, 0
    %p141 = por %p139, %p140
    %p142 = scmp.ne.s32.totalorder %s128, %s129
    %p143 = scmp.eq.s32.totalorder %s16, 1
    %p144 = por %p142, %p143
    %p146 = scmp.ne.s32.totalorder %s129, %s145
    %p147 = scmp.eq.s32.totalorder %s16, 0
    %p148 = por %p146, %p147
    %p149 = scmp.le.s32.totalorder 1, %s10
    %p150 = scmp.lt.s32.totalorder %s10, 3
    %p151 = pnand %p149, %p150
    %p152 = pneg %p151
    // Predicated region
    $region9: #{cut_forward.3} parent=5 // pred_check
      _
    $region10: #{cut_forward.3} parent=5 // pred_check_branch
      %154 = sbr.rel (%p151) target = $region12
    $region11: #{cut_forward.3} parent=5 // pred_region
      %s155 = ssub.s32 %s10, 1
      // Predicated region
      $region13: #{cut_forward.3} parent=11 // pred_check
        %p156 = pneg %p71
      $region14: #{cut_forward.3} parent=11 // pred_check_branch
        %158 = sbr.rel (%p156) target = $region16
      $region15: #{cut_forward.3} parent=11 // pred_region
        _
      $region16: #{cut_forward.3} parent=11 // pred_fallthru
        _
      // Predicated region
      $region17: #{cut_forward.3} parent=11 // pred_check
        %p159 = pneg %p92
      $region18: #{cut_forward.3} parent=11 // pred_check_branch
        %161 = sbr.rel (%p159) target = $region20
      $region19: #{cut_forward.3} parent=11 // pred_region
        _
      $region20: #{cut_forward.3} parent=11 // pred_fallthru
        _
      // Predicated region
      $region21: #{cut_forward.3} parent=11 // pred_check
        %p162 = pneg %p113
      $region22: #{cut_forward.3} parent=11 // pred_check_branch
        %164 = sbr.rel (%p162) target = $region24
      $region23: #{cut_forward.3} parent=11 // pred_region
        _
      $region24: #{cut_forward.3} parent=11 // pred_fallthru
        _
    $region12: #{cut_forward.3} parent=5 // pred_fallthru
      _
    %p165 = scmp.lt.s32.totalorder %s10, 2
    // Predicated region
    $region25: #{cut_forward.3} parent=5 // pred_check
      %p166 = pneg %p165
    $region26: #{cut_forward.3} parent=5 // pred_check_branch
      %168 = sbr.rel (%p166) target = $region28
    $region27: #{cut_forward.3} parent=5 // pred_region
      // Predicated region
      $region29: #{cut_forward.3} parent=27 // pred_check
        %p169 = pneg %p44
      $region30: #{cut_forward.3} parent=27 // pred_check_branch
        %171 = sbr.rel (%p169) target = $region32
      $region31: #{cut_forward.3} parent=27 // pred_region
        %p172 = scmp.lt.s32.totalorder %s17, 1
        %s173 = scalar_select %p172, %s17, 1
        %p174 = scmp.lt.s32.totalorder %s18, 0
        %s175 = scalar_select %p174, %s18, 0
        %s176 = smul.addr %s173, 2
        %s177 = sadd.s32 %s175, %s176
        %s178 = smul.addr %s177, 4
        %s179 = scalar_lea.vmem %s0, %s178
      $region32: #{cut_forward.3} parent=27 // pred_fallthru
        _
    $region28: #{cut_forward.3} parent=5 // pred_fallthru
      _
    %p180 = scmp.le.s32.totalorder 1, %s10
    %p181 = scmp.lt.s32.totalorder %s10, 3
    %p182 = pnand %p180, %p181
    %p183 = pneg %p182
    // Predicated region
    $region33: #{cut_forward.3} parent=5 // pred_check
      _
    $region34: #{cut_forward.3} parent=5 // pred_check_branch
      %185 = sbr.rel (%p182) target = $region36
    $region35: #{cut_forward.3} parent=5 // pred_region
      %s186 = ssub.s32 %s10, 1
      %p187 = scmp.lt.s32.totalorder %s19, 1
      %s188 = scalar_select %p187, %s19, 1
      %p189 = scmp.lt.s32.totalorder %s20, 0
      %s190 = scalar_select %p189, %s20, 0
      %s191 = smul.addr %s188, 2
      %s192 = sadd.s32 %s190, %s191
      %s193 = smul.addr %s192, 4
      %s194 = scalar_lea.vmem %s0, %s193
      %p195 = pneg %p50
      %p196 = pneg %p47
      %p197 = pneg %p71
      %p198 = pneg %p68
      %p199 = pneg %p92
      %p200 = pneg %p89
      %p201 = pneg %p113
      %p202 = pneg %p110
      %p203 = pneg %p141
      %p204 = pneg %p138
      %p205 = scmp.lt.s32.totalorder %s19, 1
      %s206 = scalar_select %p205, %s19, 1
      %p207 = scmp.lt.s32.totalorder %s20, 0
      %s208 = scalar_select %p207, %s20, 0
      %s209 = sadd.s32 %s208, %s206
      %s210 = smul.addr %s209, 8
      %s211 = scalar_lea.vmem %s4, %s210
      %p212 = scmp.lt.s32.totalorder %s19, 1
      %s213 = scalar_select %p212, %s19, 1
      %p214 = scmp.lt.s32.totalorder %s20, 0
      %s215 = scalar_select %p214, %s20, 0
      %s216 = smul.addr %s213, 2
      %s217 = sadd.s32 %s215, %s216
      %s218 = smul.addr %s217, 4
      %s219 = scalar_lea.vmem %s0, %s218
      %p220 = scmp.lt.s32.totalorder %s19, 1
      %s221 = scalar_select %p220, %s19, 1
      %p222 = scmp.lt.s32.totalorder %s20, 0
      %s223 = scalar_select %p222, %s20, 0
      %s224 = sadd.s32 %s223, %s221
      %s225 = smul.addr %s224, 8
      %s226 = scalar_lea.vmem %s4, %s225
      %v228 = vld [vmem:[%s1] sm:$0xf]
      %v229 = vld [vmem:[%s219] sm:$0xf]
      %v230 = vld [vmem:[%s219 + $0x4] sm:$0xf]
      %v233 = vunpack.c.l.b16 %v229
      %v234 = vunpack.c.l.b16 %v230
      %v235 = vpack.c.b16 %v234, %v233
      %vm237 = vcmask 130048
      %v239 = vsel %vm237, %v228, 0
      %241 = vmatprep.subr.bf16.mxu0 0
      %242 = vmatpush1.bf16.msra.mxu0 0
      %243 = vmatprep.subr.bf16.mxu0 0
      %244 = vmatpush1.bf16.msra.mxu0 0
      %245 = vmatprep.subr.bf16.mxu0 0
      %246 = vmatpush1.bf16.msra.mxu0 0
      %247 = vmatprep.subr.bf16.mxu0 0
      %248 = vmatpush1.bf16.msra.mxu0 0
      %249 = vmatprep.subr.bf16.mxu0 0
      %250 = vmatpush1.bf16.msra.mxu0 0
      %251 = vmatprep.subr.bf16.mxu0 0
      %252 = vmatpush1.bf16.msra.mxu0 0
      %253 = vmatprep.subr.bf16.mxu0 0
      %254 = vmatpush1.bf16.msra.mxu0 0
      %255 = vmatprep.subr.bf16.mxu0 0
      %256 = vmatpush1.bf16.msra.mxu0 %v235
      %257 = vmatprep.subr.bf16.mxu0 0
      %258 = vmatpush2.bf16.msra.mxu0 0
      %259 = vmatprep.subr.bf16.mxu0 0
      %260 = vmatpush2.bf16.msra.mxu0 0
      %261 = vmatprep.subr.bf16.mxu0 0
      %262 = vmatpush2.bf16.msra.mxu0 0
      %263 = vmatprep.subr.bf16.mxu0 0
      %264 = vmatpush2.bf16.msra.mxu0 0
      %265 = vmatprep.subr.bf16.mxu0 0
      %266 = vmatpush2.bf16.msra.mxu0 0
      %267 = vmatprep.subr.bf16.mxu0 0
      %268 = vmatpush2.bf16.msra.mxu0 0
      %269 = vmatprep.subr.bf16.mxu0 0
      %270 = vmatpush2.bf16.msra.mxu0 0
      %271 = vmatprep.subr.bf16.mxu0 0
      %272 = vmatpush2.bf16.msra.mxu0 0
      %273 = vmatprep.mubr.bf16.mxu0 0
      %274 = vmatmul.mubr.bf16.gmra.mxu0 %v239
      %v275 = vpop.f32.mrf.mxu0
      %v276 = vadd.f32 0.0, %v275
      %v277 = vpop.f32.mrf.mxu0
      %v278 = vpop.f32.mrf.mxu0
      %v279 = vpop.f32.mrf.mxu0
      %280 = vdwg.mxu0
      %v281 = vld [vmem:[%s2] sm:$0xff]
      %283 = vset.pattern.permute.xlu0 0
      %284 = vperm.xlu0 %283, %v281
      %v285 = vpop.permute.xlu0 %284
      %v287 = vmul.f32 %v276, %v285
      %v288 = vld [vmem:[%s3] sm:$0xff]
      %290 = vset.pattern.permute.xlu0 0
      %291 = vperm.xlu0 %290, %v288
      %v292 = vpop.permute.xlu0 %291
      %v294 = vadd.f32 %v287, %v292
      %vm295 = vcmask 523264
      %296 = vst.msk [vmem:[%s226] sm:$0xff] %vm295, %v294
      %p297 = scmp.lt.s32.totalorder %s19, 1
      %s298 = scalar_select %p297, %s19, 1
      %p299 = scmp.lt.s32.totalorder %s20, 0
      %s300 = scalar_select %p299, %s20, 0
      %s301 = sadd.s32 %s300, %s298
      %s302 = smul.addr %s301, 8
      %s303 = scalar_lea.vmem %s4, %s302
      // Predicated region
      $region37: #{cut_forward.3} parent=35 // pred_check
        %p304 = pneg %p138
      $region38: #{cut_forward.3} parent=35 // pred_check_branch
        %306 = sbr.rel (%p304) target = $region40
      $region39: #{cut_forward.3} parent=35 // pred_region
        _
      $region40: #{cut_forward.3} parent=35 // pred_fallthru
        _
    $region36: #{cut_forward.3} parent=5 // pred_fallthru
      _
    %p307 = scmp.le.s32.totalorder 2, %s10
    // Predicated region
    $region41: #{cut_forward.3} parent=5 // pred_check
      %p308 = pneg %p307
    $region42: #{cut_forward.3} parent=5 // pred_check_branch
      %310 = sbr.rel (%p308) target = $region44
    $region43: #{cut_forward.3} parent=5 // pred_region
      %s311 = ssub.s32 %s10, 2
      // Predicated region
      $region45: #{cut_forward.3} parent=43 // pred_check
        %p312 = pneg %p144
      $region46: #{cut_forward.3} parent=43 // pred_check_branch
        %314 = sbr.rel (%p312) target = $region48
      $region47: #{cut_forward.3} parent=43 // pred_region
        %p315 = scmp.lt.s32.totalorder %s21, 1
        %s316 = scalar_select %p315, %s21, 1
        %p317 = scmp.lt.s32.totalorder %s22, 0
        %s318 = scalar_select %p317, %s22, 0
        %s319 = sadd.s32 %s318, %s316
        %s320 = smul.addr %s319, 8
        %s321 = scalar_lea.vmem %s4, %s320
      $region48: #{cut_forward.3} parent=43 // pred_fallthru
        _
    $region44: #{cut_forward.3} parent=5 // pred_fallthru
      _
  $region6: #{cut_forward.3} parent=0 // loop_footer
    %s14 = sadd.s32 1, %s10
  $region7: #{cut_forward.3} parent=0 // loop_footer_branch
    %9 = sbr.rel target = $region3
  $region8: #{cut_forward.3} parent=0 // loop_exit
    _

</llo_original>
